<compile_context>
chip_gen: v5e
topology: v5e:2x2
jax: 0.10.0
libtpu: 0.0.40
codegen_flags: <defaults>
</compile_context>

<pallas_src>
import functools

import jax
import jax.numpy as jnp
from jax.experimental import pallas as pl
from jax.experimental.pallas import tpu as pltpu


MAX_ROW_TILE = 512          # Â row tile (sublane axis of the MXU lhs)
MAX_K_TILE = 2048           # Â reduction tile (lane axis of the lhs)
XW_RESIDENT_BUDGET = 12 << 20   # bytes; conservative so 2x buffering still fits v7x
AGG_VMEM_LIMIT = 48 << 20       # explicit scoped-VMEM limit for the aggregation call


def _round_up(x, m):
    return ((x + m - 1) // m) * m


def _tile_plan(n):
    """Pick (n_pad, row_tile, k_tile) for the aggregation kernel.

    n_pad is a single padded node count used for both Â axes and the activation
    rows, so activations never need re-padding between layers.
    """
    n_pad = _round_up(n, 128)                 # lane alignment for the k axis
    kt = min(MAX_K_TILE, n_pad)
    n_pad = _round_up(n_pad, kt)              # kt always divides n_pad

    # Row tile: largest candidate dividing n_pad that still leaves >= 2 blocks
    # on the "parallel" axis (keeps both v7x TensorCores busy).
    rt = None
    for cand in (MAX_ROW_TILE, 256, 128, 64, 32, 16, 8):
        if cand <= n_pad and n_pad % cand == 0 and n_pad // cand >= 2:
            rt = cand
            break
    if rt is None:
        rt = n_pad                            # tiny graph: single row block
    return n_pad, rt, kt


# ---------------------------------------------------------------------------
# Kernel 1: feature transform  XW = H @ W   (cheap: O(N * F_in * F_out))
# ---------------------------------------------------------------------------
def _xw_kernel(h_ref, w_ref, o_ref):
    o_ref[...] = jnp.dot(
        h_ref[...], w_ref[...], preferred_element_type=jnp.float32
    ).astype(o_ref.dtype)


def _feature_transform(h_pad, w_p, *, out_dtype, row_tile):
    n_rows, f_in_p = h_pad.shape
    f_out_p = w_p.shape[1]
    return pl.pallas_call(
        _xw_kernel,
        out_shape=jax.ShapeDtypeStruct((n_rows, f_out_p), out_dtype),
        grid_spec=pltpu.PrefetchScalarGridSpec(
            num_scalar_prefetch=0,
            grid=(n_rows // row_tile,),
            in_specs=[
                pl.BlockSpec((row_tile, f_in_p), lambda i: (i, 0)),
                pl.BlockSpec((f_in_p, f_out_p), lambda i: (0, 0)),
            ],
            out_specs=pl.BlockSpec((row_tile, f_out_p), lambda i: (i, 0)),
        ),
        compiler_params=pltpu.CompilerParams(dimension_semantics=("parallel",)),
    )(h_pad, w_p)


# ---------------------------------------------------------------------------
# Kernel 2: aggregation  H = Â @ XW + b  (+ optional ReLU)  -- the hot path
# ---------------------------------------------------------------------------
def _agg_kernel(a_ref, xw_ref, b_ref, o_ref, acc_ref, *,
                apply_relu, kt, xw_resident):
    k = pl.program_id(1)

    @pl.when(k == 0)
    def _():
        acc_ref[...] = jnp.zeros_like(acc_ref)

    if xw_resident:
        # XW lives in VMEM once (constant index map); slice the current k slab.
        start = pl.multiple_of(k * kt, kt)
        xw = xw_ref[pl.ds(start, kt), :]
    else:
        xw = xw_ref[...]

    acc_ref[...] += jnp.dot(a_ref[...], xw, preferred_element_type=jnp.float32)

    @pl.when(k == pl.num_programs(1) - 1)
    def _():
        h = acc_ref[...] + b_ref[...]
        if apply_relu:
            h = jnp.maximum(h, 0.0)
        o_ref[...] = h.astype(o_ref.dtype)


def gcn_layer(a_pad, h_pad, w, b, *, rt, kt, apply_relu, agg_dtype, out_dtype):
    """One GraphConv layer on a pre-padded adjacency / pre-padded activations.

    a_pad  : (n_pad, n_pad) zero-padded normalized adjacency, dtype agg_dtype.
    h_pad  : (n_pad, f_in_p) zero-row-padded activations, dtype agg_dtype.
    w, b   : (f_in_logical <= f_in_p, f_out), (f_out,)  -- float32 params.
    Returns (n_pad, round_up(f_out, 128)) in out_dtype; padded feature columns
    and padded rows are exact (zero W cols / zero bias / zero Â cols).
    """
    n_pad = a_pad.shape[0]
    f_in_p = h_pad.shape[1]
    f_out = w.shape[1]
    f_out_p = _round_up(f_out, 128)
    agg_bytes = jnp.dtype(agg_dtype).itemsize

    # Zero-padded params (exact math). Weights cast to agg_dtype so the MXU
    # sees bf16 x bf16 (f32 accumulation) on the fast path.
    w_p = jnp.zeros((f_in_p, f_out_p), agg_dtype).at[: w.shape[0], :f_out].set(
        w.astype(agg_dtype))
    b_p = jnp.zeros((1, f_out_p), jnp.float32).at[0, :f_out].set(b)

    # Hoisted feature transform (O(N * F) -- tiny next to the Â stream).
    xw = _feature_transform(h_pad, w_p, out_dtype=agg_dtype, row_tile=rt)

    # Resident XW when it fits a conservative VMEM budget; otherwise stream it.
    xw_resident = (n_pad * f_out_p * agg_bytes) <= XW_RESIDENT_BUDGET
    if xw_resident:
        xw_spec = pl.BlockSpec((n_pad, f_out_p), lambda i, k: (0, 0))
    else:
        xw_spec = pl.BlockSpec((kt, f_out_p), lambda i, k: (k, 0))

    grid = (n_pad // rt, n_pad // kt)
    out = pl.pallas_call(
        functools.partial(_agg_kernel, apply_relu=apply_relu, kt=kt,
                          xw_resident=xw_resident),
        out_shape=jax.ShapeDtypeStruct((n_pad, f_out_p), out_dtype),
        grid_spec=pltpu.PrefetchScalarGridSpec(
            num_scalar_prefetch=0,
            grid=grid,
            in_specs=[
                pl.BlockSpec((rt, kt), lambda i, k: (i, k)),   # Â tile (streamed)
                xw_spec,                                       # XW (resident/streamed)
                pl.BlockSpec((1, f_out_p), lambda i, k: (0, 0)),  # bias
            ],
            out_specs=pl.BlockSpec((rt, f_out_p), lambda i, k: (i, 0)),
            scratch_shapes=[pltpu.VMEM((rt, f_out_p), jnp.float32)],
        ),
        compiler_params=pltpu.CompilerParams(
            # rows: independent -> shard across TensorCores (2x on v7x);
            # k: reduction into the accumulator -> sequential.
            dimension_semantics=("parallel", "arbitrary"),
            # Explicit limit: > v5e's 16 MiB scoped default, < v7x's 64 MiB VMEM.
            vmem_limit_bytes=AGG_VMEM_LIMIT,
        ),
        # TODO(synk): add pipeline_mode=pl.Buffered(3) on the Â spec if an xprof
        # trace still shows exposed DMA at k-step boundaries after the tile bump.
    )(a_pad, xw, b_p)
    return out


# ---------------------------------------------------------------------------
# Graph preprocessing (done ONCE per graph; not per forward call)
# ---------------------------------------------------------------------------
def normalize_adjacency(adj):
    """Â = D^{-1/2} A D^{-1/2}."""
    deg = jnp.sum(adj, axis=1)
    d_inv_sqrt = jnp.where(deg > 0, 1.0 / jnp.sqrt(deg), 0.0)
    return adj * d_inv_sqrt[:, None] * d_inv_sqrt[None, :]


def prepare_graph(a_norm, agg_dtype=jnp.bfloat16):
    """Pad + cast Â once. Reuse the result across every forward call."""
    n = a_norm.shape[0]
    n_pad, rt, kt = _tile_plan(n)
    a_pad = jnp.zeros((n_pad, n_pad), agg_dtype).at[:n, :n].set(
        a_norm.astype(agg_dtype))
    return a_pad, dict(n=n, n_pad=n_pad, rt=rt, kt=kt)


# ---------------------------------------------------------------------------
# Full forward
# ---------------------------------------------------------------------------
def gcn_forward(a_pad, x, params, *, n, n_pad, rt, kt,
                agg_dtype=jnp.bfloat16):
    """2-layer GCN forward on a pre-padded adjacency.

    agg_dtype=jnp.float32 gives the exact reference path; bf16 halves the HBM
    traffic of the dominant N x N adjacency / activation streams.
    """
    w1, b1, w2, b2 = params
    num_classes = w2.shape[1]
    f_in_p = _round_up(x.shape[1], 128)

    # Row/lane pad the input features once (cheap: N x F, not N^2).
    x_pad = jnp.zeros((n_pad, f_in_p), agg_dtype).at[:n, : x.shape[1]].set(
        x.astype(agg_dtype))

    # Layer 1: output stays padded and in agg_dtype -> feeds layer 2 directly.
    h = gcn_layer(a_pad, x_pad, w1, b1, rt=rt, kt=kt,
                  apply_relu=True, agg_dtype=agg_dtype, out_dtype=agg_dtype)
    # Layer 2: final output in f32.
    h = gcn_layer(a_pad, h, w2, b2, rt=rt, kt=kt,
                  apply_relu=False, agg_dtype=agg_dtype, out_dtype=jnp.float32)

    # Single slice at the very end.
    return h[:n, :num_classes]


def _reference(a_norm, x, params):
    w1, b1, w2, b2 = params
    h = jnp.maximum(a_norm @ (x @ w1) + b1[None, :], 0.0)
    return a_norm @ (h @ w2) + b2[None, :]


if __name__ == "__main__":
    # Small, module-consistent shapes: node features are rows of the 128-dim
    # embedding table (nn.Embedding(10000, 128)), hidden_size=32, num_classes=16.
    N, IN_FEATS, HIDDEN, NUM_CLASSES = 64, 128, 32, 16

    key = jax.random.PRNGKey(0)
    k_x, k_adj, k_w1, k_w2 = jax.random.split(key, 4)

    # Node features (stand-in for rows of the embedding table).
    x = jax.random.normal(k_x, (N, IN_FEATS), dtype=jnp.float32)

    # Deterministic random symmetric graph with self-loops.
    adj_rand = (jax.random.uniform(k_adj, (N, N)) < 0.1).astype(jnp.float32)
    adj = jnp.clip(adj_rand + adj_rand.T + jnp.eye(N, dtype=jnp.float32), 0.0, 1.0)
    a_norm = normalize_adjacency(adj)

    # Deterministic (Glorot-style) init; biases zero, as in DGL GraphConv.
    def glorot(k, fan_in, fan_out):
        scale = jnp.sqrt(6.0 / (fan_in + fan_out))
        return jax.random.uniform(
            k, (fan_in, fan_out), minval=-scale, maxval=scale, dtype=jnp.float32)

    w1 = glorot(k_w1, IN_FEATS, HIDDEN)
    b1 = jnp.zeros((HIDDEN,), jnp.float32)
    w2 = glorot(k_w2, HIDDEN, NUM_CLASSES)
    b2 = jnp.zeros((NUM_CLASSES,), jnp.float32)
    params = (w1, b1, w2, b2)

    # --- Graph preprocessing hoisted out of the forward (done once). ---
    a_pad_bf16, plan = prepare_graph(a_norm, agg_dtype=jnp.bfloat16)
    a_pad_f32, plan_f32 = prepare_graph(a_norm, agg_dtype=jnp.float32)
    assert plan == plan_f32

    fwd = jax.jit(gcn_forward,
                  static_argnames=("n", "n_pad", "rt", "kt", "agg_dtype"))

    out_fast = jax.block_until_ready(
        fwd(a_pad_bf16, x, params, agg_dtype=jnp.bfloat16, **plan))
    out_f32 = jax.block_until_ready(
        fwd(a_pad_f32, x, params, agg_dtype=jnp.float32, **plan))

    ref = _reference(a_norm, x, params)
    assert out_fast.shape == (N, NUM_CLASSES), out_fast.shape
    assert out_f32.shape == (N, NUM_CLASSES), out_f32.shape
    assert jnp.allclose(out_f32, ref, atol=1e-3, rtol=1e-3), "f32 path mismatch"
    assert jnp.allclose(out_fast, ref, atol=5e-2, rtol=5e-2), "bf16 path mismatch"

    print("KERNEL_OK")
</pallas_src>

<mosaic_0001>
module attributes {stable_mosaic.version = 11 : i64} {
  func.func @_xw_kernel(%arg0: i32, %arg1: memref<64x128xbf16, #tpu.memory_space<vmem>>, %arg2: memref<128x128xbf16, #tpu.memory_space<vmem>>, %arg3: memref<64x128xbf16, #tpu.memory_space<vmem>>) attributes {dimension_semantics = [#tpu.dimension_semantics<parallel>], iteration_bounds = array<i64: 2>, scalar_prefetch = 0 : i64, scratch_operands = 0 : i64, tpu.core_type = #tpu.core_type<tc>, window_params = [{transform_indices = @transform_0, window_bounds = array<i64: 64, 128>}, {pipeline_mode = #tpu.pipeline_mode<synchronous>, transform_indices = @transform_1, window_bounds = array<i64: 128, 128>}, {transform_indices = @transform_2, window_bounds = array<i64: 64, 128>}]} {
    %c0 = arith.constant 0 : index
    %c0_0 = arith.constant 0 : index
    %0 = vector.load %arg1[%c0, %c0_0] : memref<64x128xbf16, #tpu.memory_space<vmem>>, vector<64x128xbf16>
    %c0_1 = arith.constant 0 : index
    %c0_2 = arith.constant 0 : index
    %1 = vector.load %arg2[%c0_1, %c0_2] : memref<128x128xbf16, #tpu.memory_space<vmem>>, vector<128x128xbf16>
    %cst = arith.constant dense<0.000000e+00> : vector<64x128xf32>
    %2 = tpu.matmul %0, %1, %cst {dimension_numbers = #tpu.dot_dimension_numbers<[1], [0], [0], [1], [0, 0, 1, 1], [], []>} : vector<64x128xbf16>, vector<128x128xbf16>, vector<64x128xf32> -> vector<64x128xf32>
    %3 = arith.truncf %2 : vector<64x128xf32> to vector<64x128xbf16>
    %c0_3 = arith.constant 0 : index
    %c0_4 = arith.constant 0 : index
    %4 = vector.load %arg3[%c0_3, %c0_4] : memref<64x128xbf16, #tpu.memory_space<vmem>>, vector<64x128xbf16>
    tpu.vector_store %arg3[%c0_3, %c0_4], %3 {strides = array<i32>} : memref<64x128xbf16, #tpu.memory_space<vmem>>, vector<64x128xbf16>,
    return
  }
  func.func @transform_0(%arg0: i32) -> (i32, i32) {
    %c0_i32 = arith.constant 0 : i32
    %c0_i32_0 = arith.constant 0 : i32
    return %arg0, %c0_i32 : i32, i32
  }
  func.func @transform_1(%arg0: i32) -> (i32, i32) {
    %c0_i32 = arith.constant 0 : i32
    %c0_i32_0 = arith.constant 0 : i32
    %c0_i32_1 = arith.constant 0 : i32
    return %c0_i32, %c0_i32_0 : i32, i32
  }
  func.func @transform_2(%arg0: i32) -> (i32, i32) {
    %c0_i32 = arith.constant 0 : i32
    %c0_i32_0 = arith.constant 0 : i32
    return %arg0, %c0_i32 : i32, i32
  }
}

module attributes {stable_mosaic.version = 11 : i64} {
  func.func @_agg_kernel(%arg0: i32, %arg1: i32, %arg2: memref<64x128xbf16, #tpu.memory_space<vmem>>, %arg3: memref<128x128xbf16, #tpu.memory_space<vmem>>, %arg4: memref<1x128xf32, #tpu.memory_space<vmem>>, %arg5: memref<64x128xf32, #tpu.memory_space<vmem>>, %arg6: memref<64x128xf32, #tpu.memory_space<vmem>>) attributes {dimension_semantics = [#tpu.dimension_semantics<parallel>, #tpu.dimension_semantics<arbitrary>], iteration_bounds = array<i64: 2, 1>, scalar_prefetch = 0 : i64, scratch_operands = 1 : i64, tpu.core_type = #tpu.core_type<tc>, window_params = [{transform_indices = @transform_0, window_bounds = array<i64: 64, 128>}, {pipeline_mode = #tpu.pipeline_mode<synchronous>, transform_indices = @transform_1, window_bounds = array<i64: 128, 128>}, {pipeline_mode = #tpu.pipeline_mode<synchronous>, transform_indices = @transform_2, window_bounds = array<i64: 1, 128>}, {transform_indices = @transform_3, window_bounds = array<i64: 64, 128>}]} {
    %c0_i32 = arith.constant 0 : i32
    %0 = arith.cmpi eq, %arg1, %c0_i32 : i32
    %1 = arith.extui %0 : i1 to i32
    %c0_i32_0 = arith.constant 0 : i32
    %2 = arith.cmpi ne, %1, %c0_i32_0 : i32
    scf.if %2 {
      %cst_9 = arith.constant 0.000000e+00 : f32
      %15 = vector.broadcast %cst_9 : f32 to vector<64x128xf32>
      %c0_10 = arith.constant 0 : index
      %c0_11 = arith.constant 0 : index
      %16 = vector.load %arg6[%c0_10, %c0_11] : memref<64x128xf32, #tpu.memory_space<vmem>>, vector<64x128xf32>
      tpu.vector_store %arg6[%c0_10, %c0_11], %15 {strides = array<i32>} : memref<64x128xf32, #tpu.memory_space<vmem>>, vector<64x128xf32>,
    } else {
    }
    %c128_i32 = arith.constant 128 : i32
    %3 = arith.muli %arg1, %c128_i32 : i32
    %4 = tpu.assume_multiple %3, 128 : i32
    %5 = arith.index_cast %4 : i32 to index
    %c0 = arith.constant 0 : index
    %6 = vector.load %arg3[%5, %c0] : memref<128x128xbf16, #tpu.memory_space<vmem>>, vector<128x128xbf16>
    %c0_1 = arith.constant 0 : index
    %c0_2 = arith.constant 0 : index
    %7 = vector.load %arg6[%c0_1, %c0_2] : memref<64x128xf32, #tpu.memory_space<vmem>>, vector<64x128xf32>
    %c0_3 = arith.constant 0 : index
    %c0_4 = arith.constant 0 : index
    %8 = vector.load %arg2[%c0_3, %c0_4] : memref<64x128xbf16, #tpu.memory_space<vmem>>, vector<64x128xbf16>
    %cst = arith.constant dense<0.000000e+00> : vector<64x128xf32>
    %9 = tpu.matmul %8, %6, %cst {dimension_numbers = #tpu.dot_dimension_numbers<[1], [0], [0], [1], [0, 0, 1, 1], [], []>} : vector<64x128xbf16>, vector<128x128xbf16>, vector<64x128xf32> -> vector<64x128xf32>
    %10 = arith.addf %7, %9 : vector<64x128xf32>
    %c0_5 = arith.constant 0 : index
    %c0_6 = arith.constant 0 : index
    %11 = vector.load %arg6[%c0_5, %c0_6] : memref<64x128xf32, #tpu.memory_space<vmem>>, vector<64x128xf32>
    tpu.vector_store %arg6[%c0_5, %c0_6], %10 {strides = array<i32>} : memref<64x128xf32, #tpu.memory_space<vmem>>, vector<64x128xf32>,
    %c0_i32_7 = arith.constant 0 : i32
    %12 = arith.cmpi eq, %arg1, %c0_i32_7 : i32
    %13 = arith.extui %12 : i1 to i32
    %c0_i32_8 = arith.constant 0 : i32
    %14 = arith.cmpi ne, %13, %c0_i32_8 : i32
    scf.if %14 {
      %c0_9 = arith.constant 0 : index
      %c0_10 = arith.constant 0 : index
      %15 = vector.load %arg6[%c0_9, %c0_10] : memref<64x128xf32, #tpu.memory_space<vmem>>, vector<64x128xf32>
      %c0_11 = arith.constant 0 : index
      %c0_12 = arith.constant 0 : index
      %16 = vector.load %arg4[%c0_11, %c0_12] : memref<1x128xf32, #tpu.memory_space<vmem>>, vector<1x128xf32>
      %17 = vector.broadcast %16 : vector<1x128xf32> to vector<64x128xf32>
      %18 = arith.addf %15, %17 : vector<64x128xf32>
      %c0_13 = arith.constant 0 : index
      %c0_14 = arith.constant 0 : index
      %19 = vector.load %arg5[%c0_13, %c0_14] : memref<64x128xf32, #tpu.memory_space<vmem>>, vector<64x128xf32>
      tpu.vector_store %arg5[%c0_13, %c0_14], %18 {strides = array<i32>} : memref<64x128xf32, #tpu.memory_space<vmem>>, vector<64x128xf32>,
    } else {
    }
    return
  }
  func.func @transform_0(%arg0: i32, %arg1: i32) -> (i32, i32) {
    %c0_i32 = arith.constant 0 : i32
    return %arg0, %arg1 : i32, i32
  }
  func.func @transform_1(%arg0: i32, %arg1: i32) -> (i32, i32) {
    %c0_i32 = arith.constant 0 : i32
    %c0_i32_0 = arith.constant 0 : i32
    %c0_i32_1 = arith.constant 0 : i32
    return %c0_i32, %c0_i32_0 : i32, i32
  }
  func.func @transform_2(%arg0: i32, %arg1: i32) -> (i32, i32) {
    %c0_i32 = arith.constant 0 : i32
    %c0_i32_0 = arith.constant 0 : i32
    %c0_i32_1 = arith.constant 0 : i32
    return %c0_i32, %c0_i32_0 : i32, i32
  }
  func.func @transform_3(%arg0: i32, %arg1: i32) -> (i32, i32) {
    %c0_i32 = arith.constant 0 : i32
    %c0_i32_0 = arith.constant 0 : i32
    return %arg0, %c0_i32 : i32, i32
  }
}

module attributes {stable_mosaic.version = 11 : i64} {
  func.func @_agg_kernel(%arg0: i32, %arg1: i32, %arg2: memref<64x128xbf16, #tpu.memory_space<vmem>>, %arg3: memref<128x128xbf16, #tpu.memory_space<vmem>>, %arg4: memref<1x128xf32, #tpu.memory_space<vmem>>, %arg5: memref<64x128xbf16, #tpu.memory_space<vmem>>, %arg6: memref<64x128xf32, #tpu.memory_space<vmem>>) attributes {dimension_semantics = [#tpu.dimension_semantics<parallel>, #tpu.dimension_semantics<arbitrary>], iteration_bounds = array<i64: 2, 1>, scalar_prefetch = 0 : i64, scratch_operands = 1 : i64, tpu.core_type = #tpu.core_type<tc>, window_params = [{transform_indices = @transform_0, window_bounds = array<i64: 64, 128>}, {pipeline_mode = #tpu.pipeline_mode<synchronous>, transform_indices = @transform_1, window_bounds = array<i64: 128, 128>}, {pipeline_mode = #tpu.pipeline_mode<synchronous>, transform_indices = @transform_2, window_bounds = array<i64: 1, 128>}, {transform_indices = @transform_3, window_bounds = array<i64: 64, 128>}]} {
    %c0_i32 = arith.constant 0 : i32
    %0 = arith.cmpi eq, %arg1, %c0_i32 : i32
    %1 = arith.extui %0 : i1 to i32
    %c0_i32_0 = arith.constant 0 : i32
    %2 = arith.cmpi ne, %1, %c0_i32_0 : i32
    scf.if %2 {
      %cst_9 = arith.constant 0.000000e+00 : f32
      %15 = vector.broadcast %cst_9 : f32 to vector<64x128xf32>
      %c0_10 = arith.constant 0 : index
      %c0_11 = arith.constant 0 : index
      %16 = vector.load %arg6[%c0_10, %c0_11] : memref<64x128xf32, #tpu.memory_space<vmem>>, vector<64x128xf32>
      tpu.vector_store %arg6[%c0_10, %c0_11], %15 {strides = array<i32>} : memref<64x128xf32, #tpu.memory_space<vmem>>, vector<64x128xf32>,
    } else {
    }
    %c128_i32 = arith.constant 128 : i32
    %3 = arith.muli %arg1, %c128_i32 : i32
    %4 = tpu.assume_multiple %3, 128 : i32
    %5 = arith.index_cast %4 : i32 to index
    %c0 = arith.constant 0 : index
    %6 = vector.load %arg3[%5, %c0] : memref<128x128xbf16, #tpu.memory_space<vmem>>, vector<128x128xbf16>
    %c0_1 = arith.constant 0 : index
    %c0_2 = arith.constant 0 : index
    %7 = vector.load %arg6[%c0_1, %c0_2] : memref<64x128xf32, #tpu.memory_space<vmem>>, vector<64x128xf32>
    %c0_3 = arith.constant 0 : index
    %c0_4 = arith.constant 0 : index
    %8 = vector.load %arg2[%c0_3, %c0_4] : memref<64x128xbf16, #tpu.memory_space<vmem>>, vector<64x128xbf16>
    %cst = arith.constant dense<0.000000e+00> : vector<64x128xf32>
    %9 = tpu.matmul %8, %6, %cst {dimension_numbers = #tpu.dot_dimension_numbers<[1], [0], [0], [1], [0, 0, 1, 1], [], []>} : vector<64x128xbf16>, vector<128x128xbf16>, vector<64x128xf32> -> vector<64x128xf32>
    %10 = arith.addf %7, %9 : vector<64x128xf32>
    %c0_5 = arith.constant 0 : index
    %c0_6 = arith.constant 0 : index
    %11 = vector.load %arg6[%c0_5, %c0_6] : memref<64x128xf32, #tpu.memory_space<vmem>>, vector<64x128xf32>
    tpu.vector_store %arg6[%c0_5, %c0_6], %10 {strides = array<i32>} : memref<64x128xf32, #tpu.memory_space<vmem>>, vector<64x128xf32>,
    %c0_i32_7 = arith.constant 0 : i32
    %12 = arith.cmpi eq, %arg1, %c0_i32_7 : i32
    %13 = arith.extui %12 : i1 to i32
    %c0_i32_8 = arith.constant 0 : i32
    %14 = arith.cmpi ne, %13, %c0_i32_8 : i32
    scf.if %14 {
      %c0_9 = arith.constant 0 : index
      %c0_10 = arith.constant 0 : index
      %15 = vector.load %arg6[%c0_9, %c0_10] : memref<64x128xf32, #tpu.memory_space<vmem>>, vector<64x128xf32>
      %c0_11 = arith.constant 0 : index
      %c0_12 = arith.constant 0 : index
      %16 = vector.load %arg4[%c0_11, %c0_12] : memref<1x128xf32, #tpu.memory_space<vmem>>, vector<1x128xf32>
      %17 = vector.broadcast %16 : vector<1x128xf32> to vector<64x128xf32>
      %18 = arith.addf %15, %17 : vector<64x128xf32>
      %cst_13 = arith.constant 0.000000e+00 : f32
      %19 = vector.broadcast %cst_13 : f32 to vector<64x128xf32>
      %20 = arith.maximumf %18, %19 : vector<64x128xf32>
      %21 = arith.truncf %20 : vector<64x128xf32> to vector<64x128xbf16>
      %c0_14 = arith.constant 0 : index
      %c0_15 = arith.constant 0 : index
      %22 = vector.load %arg5[%c0_14, %c0_15] : memref<64x128xbf16, #tpu.memory_space<vmem>>, vector<64x128xbf16>
      tpu.vector_store %arg5[%c0_14, %c0_15], %21 {strides = array<i32>} : memref<64x128xbf16, #tpu.memory_space<vmem>>, vector<64x128xbf16>,
    } else {
    }
    return
  }
  func.func @transform_0(%arg0: i32, %arg1: i32) -> (i32, i32) {
    %c0_i32 = arith.constant 0 : i32
    return %arg0, %arg1 : i32, i32
  }
  func.func @transform_1(%arg0: i32, %arg1: i32) -> (i32, i32) {
    %c0_i32 = arith.constant 0 : i32
    %c0_i32_0 = arith.constant 0 : i32
    %c0_i32_1 = arith.constant 0 : i32
    return %c0_i32, %c0_i32_0 : i32, i32
  }
  func.func @transform_2(%arg0: i32, %arg1: i32) -> (i32, i32) {
    %c0_i32 = arith.constant 0 : i32
    %c0_i32_0 = arith.constant 0 : i32
    %c0_i32_1 = arith.constant 0 : i32
    return %c0_i32, %c0_i32_0 : i32, i32
  }
  func.func @transform_3(%arg0: i32, %arg1: i32) -> (i32, i32) {
    %c0_i32 = arith.constant 0 : i32
    %c0_i32_0 = arith.constant 0 : i32
    return %arg0, %c0_i32 : i32, i32
  }
}

</mosaic_0001>

<llo_original>
// kernel: gcn_forward.4
$region0: #{gcn_forward.4}
  #allocation0 [shape = 'u32[]', space=smem, size = 0x4, offset = 0x4, fixed_abs, tag = 'smem constant byte address 0x4 - core index']
  #allocation1 [shape = 'u32[72,128]{1,0:T(1,128)}', space=vmem, size = 0x9000, scoped, tag = 'internal scratch']
  %s0 = inlined_call_operand.vmem [shape: bf16[128,128], index: 0, kind: input, shape index: {}]
  %s1 = inlined_call_operand.vmem [shape: bf16[128,128], index: 1, kind: input, shape index: {}]
  %s2 = inlined_call_operand.vmem [shape: bf16[128,128], index: 2, kind: output, shape index: {}]
  %s3 = sld [smem:[#allocation0]]
  $region41: #{gcn_forward.4} parent=0
    _
  %s5 = ssub.s32 1, %s3
  %s6 = scalar_select 0, %s5, %s3
  loop: start=0, step=1, limit=4
  $region2: #{gcn_forward.4} parent=0 // loop_pre_header
    _
  $region3: #{gcn_forward.4} parent=0 // loop_header
    %s8 = sphi 0, %s12
    %p9 = scmp.ge.s32.totalorder %s8, 4
    %s18 = sphi 0, %s20
    %s21 = sphi 0, %s18
    %s22 = sphi 0, %s21
    %s38 = sphi 0, %s22
    %s42 = sphi 0, %s42
    %s44 = sphi 0, %s42
    %s45 = sphi 0, %s44
    %s59 = sphi 0, %s45
    %s65 = sphi 0, %s67
    %s68 = sphi 0, %s65
    %s69 = sphi 0, %s68
    %s85 = sphi 0, %s69
  $region4: #{gcn_forward.4} parent=0 // loop_header_branch
    %11 = sbr.rel (%p9) target = $region8
  $region5: #{gcn_forward.4} parent=0 // loop_body
    %s13 = ssub.s32 %s8, 1
    %s14 = ssub.s32 %s8, 2
    %s15 = sadd.s32 %s8, 1
    %s16 = ssub.s32 %s8, %s15
    %p17 = scmp.eq.s32.totalorder %s16, 0
    %s19 = sadd.s32 %s18, 1
    %s20 = scalar_select %p17, %s18, %s19
    %p23 = pneg %p17
    %p24 = scmp.eq.s32.totalorder %s8, 1
    %p25 = por %p23, %p24
    %p26 = scmp.ne.s32.totalorder %s18, %s21
    %p27 = scmp.eq.s32.totalorder %s8, 0
    %p28 = por %p26, %p27
    %p29 = scmp.ne.s32.totalorder %s18, %s21
    %p30 = scmp.eq.s32.totalorder %s13, 1
    %p31 = por %p29, %p30
    %p32 = scmp.ne.s32.totalorder %s21, %s22
    %p33 = scmp.eq.s32.totalorder %s13, 0
    %p34 = por %p32, %p33
    %p35 = scmp.ne.s32.totalorder %s21, %s22
    %p36 = scmp.eq.s32.totalorder %s14, 1
    %p37 = por %p35, %p36
    %p39 = scmp.ne.s32.totalorder %s22, %s38
    %p40 = scmp.eq.s32.totalorder %s14, 0
    %p41 = por %p39, %p40
    %s43 = sadd.s32 %s42, 1
    %p46 = scmp.eq.s32.totalorder %s8, 1
    %p47 = scmp.ne.s32.totalorder %s42, %s44
    %p48 = scmp.eq.s32.totalorder %s8, 0
    %p49 = por %p47, %p48
    %p50 = scmp.ne.s32.totalorder %s42, %s44
    %p51 = scmp.eq.s32.totalorder %s13, 1
    %p52 = por %p50, %p51
    %p53 = scmp.ne.s32.totalorder %s44, %s45
    %p54 = scmp.eq.s32.totalorder %s13, 0
    %p55 = por %p53, %p54
    %p56 = scmp.ne.s32.totalorder %s44, %s45
    %p57 = scmp.eq.s32.totalorder %s14, 1
    %p58 = por %p56, %p57
    %p60 = scmp.ne.s32.totalorder %s45, %s59
    %p61 = scmp.eq.s32.totalorder %s14, 0
    %p62 = por %p60, %p61
    %s63 = ssub.s32 %s8, %s15
    %p64 = scmp.eq.s32.totalorder %s63, 0
    %s66 = sadd.s32 %s65, 1
    %s67 = scalar_select %p64, %s65, %s66
    %p70 = pneg %p64
    %p71 = scmp.eq.s32.totalorder %s8, 1
    %p72 = por %p70, %p71
    %p73 = scmp.ne.s32.totalorder %s65, %s68
    %p74 = scmp.eq.s32.totalorder %s8, 0
    %p75 = por %p73, %p74
    %p76 = scmp.ne.s32.totalorder %s65, %s68
    %p77 = scmp.eq.s32.totalorder %s13, 1
    %p78 = por %p76, %p77
    %p79 = scmp.ne.s32.totalorder %s68, %s69
    %p80 = scmp.eq.s32.totalorder %s13, 0
    %p81 = por %p79, %p80
    %p82 = scmp.ne.s32.totalorder %s68, %s69
    %p83 = scmp.eq.s32.totalorder %s14, 1
    %p84 = por %p82, %p83
    %p86 = scmp.ne.s32.totalorder %s69, %s85
    %p87 = scmp.eq.s32.totalorder %s14, 0
    %p88 = por %p86, %p87
    %p89 = scmp.le.s32.totalorder 1, %s8
    %p90 = scmp.lt.s32.totalorder %s8, 3
    %p91 = pnand %p89, %p90
    %p92 = pneg %p91
    // Predicated region
    $region9: #{gcn_forward.4} parent=5 // pred_check
      _
    $region10: #{gcn_forward.4} parent=5 // pred_check_branch
      %94 = sbr.rel (%p91) target = $region12
    $region11: #{gcn_forward.4} parent=5 // pred_region
      %s95 = ssub.s32 %s8, 1
      // Predicated region
      $region13: #{gcn_forward.4} parent=11 // pred_check
        %p96 = pneg %p55
      $region14: #{gcn_forward.4} parent=11 // pred_check_branch
        %98 = sbr.rel (%p96) target = $region16
      $region15: #{gcn_forward.4} parent=11 // pred_region
        _
      $region16: #{gcn_forward.4} parent=11 // pred_fallthru
        _
    $region12: #{gcn_forward.4} parent=5 // pred_fallthru
      _
    %p99 = scmp.lt.s32.totalorder %s8, 2
    // Predicated region
    $region17: #{gcn_forward.4} parent=5 // pred_check
      %p100 = pneg %p99
    $region18: #{gcn_forward.4} parent=5 // pred_check_branch
      %102 = sbr.rel (%p100) target = $region20
    $region19: #{gcn_forward.4} parent=5 // pred_region
      // Predicated region
      $region21: #{gcn_forward.4} parent=19 // pred_check
        %p103 = pneg %p28
      $region22: #{gcn_forward.4} parent=19 // pred_check_branch
        %105 = sbr.rel (%p103) target = $region24
      $region23: #{gcn_forward.4} parent=19 // pred_region
        %s106 = smul.u32 8, %s8
        %p107 = scmp.lt.s32.totalorder %s106, 15
        %s108 = scalar_select %p107, %s106, 15
        %s109 = smul.addr %s108, 4
        %s110 = scalar_lea.vmem %s0, %s109
        %s111 = smul.u32 8, %s8
      $region24: #{gcn_forward.4} parent=19 // pred_fallthru
        _
    $region20: #{gcn_forward.4} parent=5 // pred_fallthru
      _
    %p112 = scmp.le.s32.totalorder 1, %s8
    %p113 = scmp.lt.s32.totalorder %s8, 3
    %p114 = pnand %p112, %p113
    %p115 = pneg %p114
    // Predicated region
    $region25: #{gcn_forward.4} parent=5 // pred_check
      _
    $region26: #{gcn_forward.4} parent=5 // pred_check_branch
      %117 = sbr.rel (%p114) target = $region28
    $region27: #{gcn_forward.4} parent=5 // pred_region
      %s118 = ssub.s32 %s8, 1
      %s119 = smul.u32 8, %s13
      %p120 = scmp.lt.s32.totalorder %s119, 15
      %s121 = scalar_select %p120, %s119, 15
      %s122 = smul.addr %s121, 4
      %s123 = scalar_lea.vmem %s0, %s122
      %p124 = pneg %p34
      %p125 = pneg %p31
      %p126 = pneg %p55
      %p127 = pneg %p52
      %p128 = pneg %p81
      %p129 = pneg %p78
      %s130 = smul.u32 8, %s13
      %p131 = scmp.lt.s32.totalorder %s130, 15
      %s132 = scalar_select %p131, %s130, 15
      %s133 = smul.addr %s132, 4
      %s134 = scalar_lea.vmem %s2, %s133
      %s135 = smul.u32 8, %s13
      %p136 = scmp.lt.s32.totalorder %s135, 15
      %s137 = scalar_select %p136, %s135, 15
      %s138 = smul.addr %s137, 4
      %s139 = scalar_lea.vmem %s0, %s138
      %s140 = smul.u32 8, %s13
      %s141 = smul.u32 8, %s13
      %p142 = scmp.lt.s32.totalorder %s141, 15
      %s143 = scalar_select %p142, %s141, 15
      %s144 = smul.addr %s143, 4
      %s145 = scalar_lea.vmem %s2, %s144
      %s146 = smul.u32 8, %s13
      %v147 = vld [vmem:[%s139] sm:$0xf]
      %v148 = vld [vmem:[%s139 + $0x4] sm:$0xf]
      %v149 = vld [vmem:[%s139 + $0x8] sm:$0xf]
      %v150 = vld [vmem:[%s139 + $0xc] sm:$0xf]
      %v151 = vld [vmem:[%s139 + $0x10] sm:$0xf]
      %v152 = vld [vmem:[%s139 + $0x14] sm:$0xf]
      %v153 = vld [vmem:[%s139 + $0x18] sm:$0xf]
      %v154 = vld [vmem:[%s139 + $0x1c] sm:$0xf]
      %v155 = vld [vmem:[%s1] sm:$0xf]
      %v156 = vld [vmem:[%s1 + $0x4] sm:$0xf]
      %v157 = vld [vmem:[%s1 + $0x8] sm:$0xf]
      %v158 = vld [vmem:[%s1 + $0xc] sm:$0xf]
      %v159 = vld [vmem:[%s1 + $0x10] sm:$0xf]
      %v160 = vld [vmem:[%s1 + $0x14] sm:$0xf]
      %v161 = vld [vmem:[%s1 + $0x18] sm:$0xf]
      %v162 = vld [vmem:[%s1 + $0x1c] sm:$0xf]
      %v163 = vld [vmem:[%s1 + $0x20] sm:$0xf]
      %v164 = vld [vmem:[%s1 + $0x24] sm:$0xf]
      %v165 = vld [vmem:[%s1 + $0x28] sm:$0xf]
      %v166 = vld [vmem:[%s1 + $0x2c] sm:$0xf]
      %v167 = vld [vmem:[%s1 + $0x30] sm:$0xf]
      %v168 = vld [vmem:[%s1 + $0x34] sm:$0xf]
      %v169 = vld [vmem:[%s1 + $0x38] sm:$0xf]
      %v170 = vld [vmem:[%s1 + $0x3c] sm:$0xf]
      %v179 = vunpack.c.l.b16 %v147
      %v180 = vunpack.c.l.b16 %v148
      %v181 = vunpack.c.l.b16 %v149
      %v182 = vunpack.c.l.b16 %v150
      %v183 = vunpack.c.l.b16 %v151
      %v184 = vunpack.c.l.b16 %v152
      %v185 = vunpack.c.l.b16 %v153
      %v186 = vunpack.c.l.b16 %v154
      %v187 = vpack.c.b16 %v180, %v179
      %v188 = vpack.c.b16 %v182, %v181
      %v189 = vpack.c.b16 %v184, %v183
      %v190 = vpack.c.b16 %v186, %v185
      %v211 = vunpack.c.l.b16 %v155
      %v212 = vunpack.c.l.b16 %v156
      %v213 = vunpack.c.l.b16 %v157
      %v214 = vunpack.c.l.b16 %v158
      %v215 = vunpack.c.l.b16 %v159
      %v216 = vunpack.c.l.b16 %v160
      %v217 = vunpack.c.l.b16 %v161
      %v218 = vunpack.c.l.b16 %v162
      %v219 = vunpack.c.l.b16 %v163
      %v220 = vunpack.c.l.b16 %v164
      %v221 = vunpack.c.l.b16 %v165
      %v222 = vunpack.c.l.b16 %v166
      %v223 = vunpack.c.l.b16 %v167
      %v224 = vunpack.c.l.b16 %v168
      %v225 = vunpack.c.l.b16 %v169
      %v226 = vunpack.c.l.b16 %v170
      %v227 = vpack.c.b16 %v212, %v211
      %v228 = vpack.c.b16 %v214, %v213
      %v229 = vpack.c.b16 %v216, %v215
      %v230 = vpack.c.b16 %v218, %v217
      %v231 = vpack.c.b16 %v220, %v219
      %v232 = vpack.c.b16 %v222, %v221
      %v233 = vpack.c.b16 %v224, %v223
      %v234 = vpack.c.b16 %v226, %v225
      %243 = vmatpush.bf16.msra.mxu0 %v234
      %244 = vmatpush.bf16.msra.mxu0 %v233
      %245 = vmatpush.bf16.msra.mxu0 %v232
      %246 = vmatpush.bf16.msra.mxu0 %v231
      %247 = vmatpush.bf16.msra.mxu0 %v230
      %248 = vmatpush.bf16.msra.mxu0 %v229
      %249 = vmatpush.bf16.msra.mxu0 %v228
      %250 = vmatpush.bf16.msra.mxu0 %v227
      %251 = vmatmul.bf16.gmra.mxu0 %v187
      %v252 = vpop.f32.mrf.mxu0
      %v253 = vadd.f32 0.0, %v252
      %v254 = vpop.f32.mrf.mxu0
      %v255 = vadd.f32 0.0, %v254
      %256 = vmatmul.bf16.gmra.mxu0 %v188
      %v257 = vpop.f32.mrf.mxu0
      %v258 = vadd.f32 0.0, %v257
      %v259 = vpop.f32.mrf.mxu0
      %v260 = vadd.f32 0.0, %v259
      %261 = vmatmul.bf16.gmra.mxu0 %v189
      %v262 = vpop.f32.mrf.mxu0
      %v263 = vadd.f32 0.0, %v262
      %v264 = vpop.f32.mrf.mxu0
      %v265 = vadd.f32 0.0, %v264
      %266 = vmatmul.bf16.gmra.mxu0 %v190
      %v267 = vpop.f32.mrf.mxu0
      %v268 = vadd.f32 0.0, %v267
      %v269 = vpop.f32.mrf.mxu0
      %v270 = vadd.f32 0.0, %v269
      %271 = vdwg.mxu0
      %v272 = vpack.c.bf16 %v253, %v253
      %v273 = vpack.c.bf16 %v255, %v255
      %v274 = vpack.c.bf16 %v258, %v258
      %v275 = vpack.c.bf16 %v260, %v260
      %v276 = vpack.c.bf16 %v263, %v263
      %v277 = vpack.c.bf16 %v265, %v265
      %v278 = vpack.c.bf16 %v268, %v268
      %v279 = vpack.c.bf16 %v270, %v270
      %280 = vst [vmem:[%s145] sm:$0xf] %v272
      %281 = vst [vmem:[%s145 + $0x4] sm:$0xf] %v273
      %282 = vst [vmem:[%s145 + $0x8] sm:$0xf] %v274
      %283 = vst [vmem:[%s145 + $0xc] sm:$0xf] %v275
      %284 = vst [vmem:[%s145 + $0x10] sm:$0xf] %v276
      %285 = vst [vmem:[%s145 + $0x14] sm:$0xf] %v277
      %286 = vst [vmem:[%s145 + $0x18] sm:$0xf] %v278
      %287 = vst [vmem:[%s145 + $0x1c] sm:$0xf] %v279
      %s288 = smul.u32 8, %s13
      %p289 = scmp.lt.s32.totalorder %s288, 15
      %s290 = scalar_select %p289, %s288, 15
      %s291 = smul.addr %s290, 4
      %s292 = scalar_lea.vmem %s2, %s291
      // Predicated region
      $region29: #{gcn_forward.4} parent=27 // pred_check
        %p293 = pneg %p78
      $region30: #{gcn_forward.4} parent=27 // pred_check_branch
        %295 = sbr.rel (%p293) target = $region32
      $region31: #{gcn_forward.4} parent=27 // pred_region
        %s296 = smul.u32 8, %s13
      $region32: #{gcn_forward.4} parent=27 // pred_fallthru
        _
    $region28: #{gcn_forward.4} parent=5 // pred_fallthru
      _
    %p297 = scmp.le.s32.totalorder 2, %s8
    // Predicated region
    $region33: #{gcn_forward.4} parent=5 // pred_check
      %p298 = pneg %p297
    $region34: #{gcn_forward.4} parent=5 // pred_check_branch
      %300 = sbr.rel (%p298) target = $region36
    $region35: #{gcn_forward.4} parent=5 // pred_region
      %s301 = ssub.s32 %s8, 2
      // Predicated region
      $region37: #{gcn_forward.4} parent=35 // pred_check
        %p302 = pneg %p84
      $region38: #{gcn_forward.4} parent=35 // pred_check_branch
        %304 = sbr.rel (%p302) target = $region40
      $region39: #{gcn_forward.4} parent=35 // pred_region
        %s305 = smul.u32 8, %s14
        %p306 = scmp.lt.s32.totalorder %s305, 15
        %s307 = scalar_select %p306, %s305, 15
        %s308 = smul.addr %s307, 4
        %s309 = scalar_lea.vmem %s2, %s308
      $region40: #{gcn_forward.4} parent=35 // pred_fallthru
        _
    $region36: #{gcn_forward.4} parent=5 // pred_fallthru
      _
  $region6: #{gcn_forward.4} parent=0 // loop_footer
    %s12 = sadd.s32 1, %s8
  $region7: #{gcn_forward.4} parent=0 // loop_footer_branch
    %7 = sbr.rel target = $region3
  $region8: #{gcn_forward.4} parent=0 // loop_exit
    _

// kernel: gcn_forward.7
$region0: #{gcn_forward.7}
  #allocation0 [shape = 'u32[]', space=smem, size = 0x4, offset = 0x4, fixed_abs, tag = 'smem constant byte address 0x4 - core index']
  #allocation1 [shape = 'u32[72,128]{1,0:T(1,128)}', space=vmem, size = 0x9000, scoped, tag = 'internal scratch']
  #allocation2 [shape = 'f32[64,128]{1,0:T(8,128)}', space=vmem, size = 0x8000, scoped, tag = 'scratch operand']
  %s0 = inlined_call_operand.vmem [shape: bf16[128,128], index: 0, kind: input, shape index: {}]
  %s1 = inlined_call_operand.vmem [shape: bf16[128,128], index: 1, kind: input, shape index: {}]
  %s2 = inlined_call_operand.vmem [shape: f32[1,128], index: 2, kind: input, shape index: {}]
  %s3 = inlined_call_operand.vmem [shape: f32[128,128], index: 3, kind: output, shape index: {}]
  %s4 = sld [smem:[#allocation0]]
  $region53: #{gcn_forward.7} parent=0
    _
  %s6 = ssub.s32 1, %s4
  %s7 = scalar_select 0, %s6, %s4
  loop: start=0, step=1, limit=4
  $region2: #{gcn_forward.7} parent=0 // loop_pre_header
    _
  $region3: #{gcn_forward.7} parent=0 // loop_header
    %s9 = sphi 0, %s13
    %p10 = scmp.ge.s32.totalorder %s9, 4
    %s16 = sphi 0, %s28
    %s17 = sphi 0, %s24
    %s18 = sphi 0, %s16
    %s19 = sphi 0, %s17
    %s20 = sphi 0, %s18
    %s21 = sphi 0, %s19
    %s33 = sphi 0, %s35
    %s36 = sphi 0, %s33
    %s37 = sphi 0, %s36
    %s53 = sphi 0, %s37
    %s57 = sphi 0, %s57
    %s59 = sphi 0, %s57
    %s60 = sphi 0, %s59
    %s74 = sphi 0, %s60
    %s78 = sphi 0, %s78
    %s80 = sphi 0, %s78
    %s81 = sphi 0, %s80
    %s95 = sphi 0, %s81
    %s101 = sphi 0, %s103
    %s104 = sphi 0, %s101
    %s105 = sphi 0, %s104
    %s121 = sphi 0, %s105
  $region4: #{gcn_forward.7} parent=0 // loop_header_branch
    %12 = sbr.rel (%p10) target = $region8
  $region5: #{gcn_forward.7} parent=0 // loop_body
    %s14 = ssub.s32 %s9, 1
    %s15 = ssub.s32 %s9, 2
    %s22 = sadd.s32 1, %s17
    %p23 = scmp.ge.s32.totalorder %s22, 1
    %s24 = scalar_select %p23, 0, %s22
    %s25 = sadd.s32 1, %s16
    %s26 = scalar_select %p23, %s25, %s16
    %p27 = scmp.ge.s32.totalorder %s26, 2
    %s28 = scalar_select %p27, 0, %s26
    %s29 = ssub.s32 %s16, %s28
    %s30 = ssub.s32 %s17, %s24
    %s31 = sor.u32 %s29, %s30
    %p32 = scmp.eq.s32.totalorder %s31, 0
    %s34 = sadd.s32 %s33, 1
    %s35 = scalar_select %p32, %s33, %s34
    %p38 = pneg %p32
    %p39 = scmp.eq.s32.totalorder %s9, 1
    %p40 = por %p38, %p39
    %p41 = scmp.ne.s32.totalorder %s33, %s36
    %p42 = scmp.eq.s32.totalorder %s9, 0
    %p43 = por %p41, %p42
    %p44 = scmp.ne.s32.totalorder %s33, %s36
    %p45 = scmp.eq.s32.totalorder %s14, 1
    %p46 = por %p44, %p45
    %p47 = scmp.ne.s32.totalorder %s36, %s37
    %p48 = scmp.eq.s32.totalorder %s14, 0
    %p49 = por %p47, %p48
    %p50 = scmp.ne.s32.totalorder %s36, %s37
    %p51 = scmp.eq.s32.totalorder %s15, 1
    %p52 = por %p50, %p51
    %p54 = scmp.ne.s32.totalorder %s37, %s53
    %p55 = scmp.eq.s32.totalorder %s15, 0
    %p56 = por %p54, %p55
    %s58 = sadd.s32 %s57, 1
    %p61 = scmp.eq.s32.totalorder %s9, 1
    %p62 = scmp.ne.s32.totalorder %s57, %s59
    %p63 = scmp.eq.s32.totalorder %s9, 0
    %p64 = por %p62, %p63
    %p65 = scmp.ne.s32.totalorder %s57, %s59
    %p66 = scmp.eq.s32.totalorder %s14, 1
    %p67 = por %p65, %p66
    %p68 = scmp.ne.s32.totalorder %s59, %s60
    %p69 = scmp.eq.s32.totalorder %s14, 0
    %p70 = por %p68, %p69
    %p71 = scmp.ne.s32.totalorder %s59, %s60
    %p72 = scmp.eq.s32.totalorder %s15, 1
    %p73 = por %p71, %p72
    %p75 = scmp.ne.s32.totalorder %s60, %s74
    %p76 = scmp.eq.s32.totalorder %s15, 0
    %p77 = por %p75, %p76
    %s79 = sadd.s32 %s78, 1
    %p82 = scmp.eq.s32.totalorder %s9, 1
    %p83 = scmp.ne.s32.totalorder %s78, %s80
    %p84 = scmp.eq.s32.totalorder %s9, 0
    %p85 = por %p83, %p84
    %p86 = scmp.ne.s32.totalorder %s78, %s80
    %p87 = scmp.eq.s32.totalorder %s14, 1
    %p88 = por %p86, %p87
    %p89 = scmp.ne.s32.totalorder %s80, %s81
    %p90 = scmp.eq.s32.totalorder %s14, 0
    %p91 = por %p89, %p90
    %p92 = scmp.ne.s32.totalorder %s80, %s81
    %p93 = scmp.eq.s32.totalorder %s15, 1
    %p94 = por %p92, %p93
    %p96 = scmp.ne.s32.totalorder %s81, %s95
    %p97 = scmp.eq.s32.totalorder %s15, 0
    %p98 = por %p96, %p97
    %s99 = ssub.s32 %s16, %s28
    %p100 = scmp.eq.s32.totalorder %s99, 0
    %s102 = sadd.s32 %s101, 1
    %s103 = scalar_select %p100, %s101, %s102
    %p106 = pneg %p100
    %p107 = scmp.eq.s32.totalorder %s9, 1
    %p108 = por %p106, %p107
    %p109 = scmp.ne.s32.totalorder %s101, %s104
    %p110 = scmp.eq.s32.totalorder %s9, 0
    %p111 = por %p109, %p110
    %p112 = scmp.ne.s32.totalorder %s101, %s104
    %p113 = scmp.eq.s32.totalorder %s14, 1
    %p114 = por %p112, %p113
    %p115 = scmp.ne.s32.totalorder %s104, %s105
    %p116 = scmp.eq.s32.totalorder %s14, 0
    %p117 = por %p115, %p116
    %p118 = scmp.ne.s32.totalorder %s104, %s105
    %p119 = scmp.eq.s32.totalorder %s15, 1
    %p120 = por %p118, %p119
    %p122 = scmp.ne.s32.totalorder %s105, %s121
    %p123 = scmp.eq.s32.totalorder %s15, 0
    %p124 = por %p122, %p123
    %p125 = scmp.le.s32.totalorder 1, %s9
    %p126 = scmp.lt.s32.totalorder %s9, 3
    %p127 = pnand %p125, %p126
    %p128 = pneg %p127
    // Predicated region
    $region9: #{gcn_forward.7} parent=5 // pred_check
      _
    $region10: #{gcn_forward.7} parent=5 // pred_check_branch
      %130 = sbr.rel (%p127) target = $region12
    $region11: #{gcn_forward.7} parent=5 // pred_region
      %s131 = ssub.s32 %s9, 1
      // Predicated region
      $region13: #{gcn_forward.7} parent=11 // pred_check
        %p132 = pneg %p70
      $region14: #{gcn_forward.7} parent=11 // pred_check_branch
        %134 = sbr.rel (%p132) target = $region16
      $region15: #{gcn_forward.7} parent=11 // pred_region
        _
      $region16: #{gcn_forward.7} parent=11 // pred_fallthru
        _
      // Predicated region
      $region17: #{gcn_forward.7} parent=11 // pred_check
        %p135 = pneg %p91
      $region18: #{gcn_forward.7} parent=11 // pred_check_branch
        %137 = sbr.rel (%p135) target = $region20
      $region19: #{gcn_forward.7} parent=11 // pred_region
        _
      $region20: #{gcn_forward.7} parent=11 // pred_fallthru
        _
    $region12: #{gcn_forward.7} parent=5 // pred_fallthru
      _
    %p138 = scmp.lt.s32.totalorder %s9, 2
    // Predicated region
    $region21: #{gcn_forward.7} parent=5 // pred_check
      %p139 = pneg %p138
    $region22: #{gcn_forward.7} parent=5 // pred_check_branch
      %141 = sbr.rel (%p139) target = $region24
    $region23: #{gcn_forward.7} parent=5 // pred_region
      // Predicated region
      $region25: #{gcn_forward.7} parent=23 // pred_check
        %p142 = pneg %p43
      $region26: #{gcn_forward.7} parent=23 // pred_check_branch
        %144 = sbr.rel (%p142) target = $region28
      $region27: #{gcn_forward.7} parent=23 // pred_region
        %s145 = smul.u32 8, %s16
        %p146 = scmp.lt.s32.totalorder %s145, 15
        %s147 = scalar_select %p146, %s145, 15
        %p148 = scmp.lt.s32.totalorder %s17, 0
        %s149 = scalar_select %p148, %s17, 0
        %s150 = sadd.s32 %s149, %s147
        %s151 = smul.addr %s150, 4
        %s152 = scalar_lea.vmem %s0, %s151
        %s153 = smul.u32 8, %s16
      $region28: #{gcn_forward.7} parent=23 // pred_fallthru
        _
    $region24: #{gcn_forward.7} parent=5 // pred_fallthru
      _
    %p154 = scmp.le.s32.totalorder 1, %s9
    %p155 = scmp.lt.s32.totalorder %s9, 3
    %p156 = pnand %p154, %p155
    %p157 = pneg %p156
    // Predicated region
    $region29: #{gcn_forward.7} parent=5 // pred_check
      _
    $region30: #{gcn_forward.7} parent=5 // pred_check_branch
      %159 = sbr.rel (%p156) target = $region32
    $region31: #{gcn_forward.7} parent=5 // pred_region
      %s160 = ssub.s32 %s9, 1
      %s161 = smul.u32 8, %s18
      %p162 = scmp.lt.s32.totalorder %s161, 15
      %s163 = scalar_select %p162, %s161, 15
      %p164 = scmp.lt.s32.totalorder %s19, 0
      %s165 = scalar_select %p164, %s19, 0
      %s166 = sadd.s32 %s165, %s163
      %s167 = smul.addr %s166, 4
      %s168 = scalar_lea.vmem %s0, %s167
      %p169 = pneg %p49
      %p170 = pneg %p46
      %p171 = pneg %p70
      %p172 = pneg %p67
      %p173 = pneg %p91
      %p174 = pneg %p88
      %p175 = pneg %p117
      %p176 = pneg %p114
      %s177 = smul.u32 8, %s18
      %p178 = scmp.lt.s32.totalorder %s177, 15
      %s179 = scalar_select %p178, %s177, 15
      %s180 = smul.addr %s179, 8
      %s181 = scalar_lea.vmem %s3, %s180
      %s182 = smul.u32 8, %s18
      %p183 = scmp.lt.s32.totalorder %s182, 15
      %s184 = scalar_select %p183, %s182, 15
      %p185 = scmp.lt.s32.totalorder %s19, 0
      %s186 = scalar_select %p185, %s19, 0
      %s187 = sadd.s32 %s186, %s184
      %s188 = smul.addr %s187, 4
      %s189 = scalar_lea.vmem %s0, %s188
      %s190 = smul.u32 8, %s18
      %s191 = smul.u32 8, %s18
      %p192 = scmp.lt.s32.totalorder %s191, 15
      %s193 = scalar_select %p192, %s191, 15
      %s194 = smul.addr %s193, 8
      %s195 = scalar_lea.vmem %s3, %s194
      %s196 = smul.u32 8, %s18
      %p197 = scmp.eq.s32.totalorder %s19, 0
      // Predicated region
      $region33: #{gcn_forward.7} parent=31 // pred_check
        %p198 = pneg %p197
      $region34: #{gcn_forward.7} parent=31 // pred_check_branch
        %200 = sbr.rel (%p198) target = $region36
      $region35: #{gcn_forward.7} parent=31 // pred_region
        %201 = vst [vmem:[#allocation2] sm:$0xff] 0.0
        %202 = vst [vmem:[#allocation2 + $0x8] sm:$0xff] 0.0
        %203 = vst [vmem:[#allocation2 + $0x10] sm:$0xff] 0.0
        %204 = vst [vmem:[#allocation2 + $0x18] sm:$0xff] 0.0
        %205 = vst [vmem:[#allocation2 + $0x20] sm:$0xff] 0.0
        %206 = vst [vmem:[#allocation2 + $0x28] sm:$0xff] 0.0
        %207 = vst [vmem:[#allocation2 + $0x30] sm:$0xff] 0.0
        %208 = vst [vmem:[#allocation2 + $0x38] sm:$0xff] 0.0
      $region36: #{gcn_forward.7} parent=31 // pred_fallthru
        _
      %s209 = smul.u32 %s19, 128
      %s210 = sshra.s32 %s209, 3
      %s211 = sand.u32 %s209, 7
      %s212 = smul.addr %s210, 4
      %s213 = scalar_lea.vmem %s1, %s212
      %v214 = vld [vmem:[%s213] sm:$0xf]
      %v215 = vld [vmem:[%s213 + $0x4] sm:$0xf]
      %v216 = vld [vmem:[%s213 + $0x8] sm:$0xf]
      %v217 = vld [vmem:[%s213 + $0xc] sm:$0xf]
      %v218 = vld [vmem:[%s213 + $0x10] sm:$0xf]
      %v219 = vld [vmem:[%s213 + $0x14] sm:$0xf]
      %v220 = vld [vmem:[%s213 + $0x18] sm:$0xf]
      %v221 = vld [vmem:[%s213 + $0x1c] sm:$0xf]
      %v222 = vld [vmem:[%s213 + $0x20] sm:$0xf]
      %v223 = vld [vmem:[%s213 + $0x24] sm:$0xf]
      %v224 = vld [vmem:[%s213 + $0x28] sm:$0xf]
      %v225 = vld [vmem:[%s213 + $0x2c] sm:$0xf]
      %v226 = vld [vmem:[%s213 + $0x30] sm:$0xf]
      %v227 = vld [vmem:[%s213 + $0x34] sm:$0xf]
      %v228 = vld [vmem:[%s213 + $0x38] sm:$0xf]
      %v229 = vld [vmem:[%s213 + $0x3c] sm:$0xf]
      %v230 = vld [vmem:[#allocation2] sm:$0xff]
      %v231 = vld [vmem:[#allocation2 + $0x8] sm:$0xff]
      %v232 = vld [vmem:[#allocation2 + $0x10] sm:$0xff]
      %v233 = vld [vmem:[#allocation2 + $0x18] sm:$0xff]
      %v234 = vld [vmem:[#allocation2 + $0x20] sm:$0xff]
      %v235 = vld [vmem:[#allocation2 + $0x28] sm:$0xff]
      %v236 = vld [vmem:[#allocation2 + $0x30] sm:$0xff]
      %v237 = vld [vmem:[#allocation2 + $0x38] sm:$0xff]
      %v238 = vld [vmem:[%s189] sm:$0xf]
      %v239 = vld [vmem:[%s189 + $0x4] sm:$0xf]
      %v240 = vld [vmem:[%s189 + $0x8] sm:$0xf]
      %v241 = vld [vmem:[%s189 + $0xc] sm:$0xf]
      %v242 = vld [vmem:[%s189 + $0x10] sm:$0xf]
      %v243 = vld [vmem:[%s189 + $0x14] sm:$0xf]
      %v244 = vld [vmem:[%s189 + $0x18] sm:$0xf]
      %v245 = vld [vmem:[%s189 + $0x1c] sm:$0xf]
      %v254 = vunpack.c.l.b16 %v238
      %v255 = vunpack.c.l.b16 %v239
      %v256 = vunpack.c.l.b16 %v240
      %v257 = vunpack.c.l.b16 %v241
      %v258 = vunpack.c.l.b16 %v242
      %v259 = vunpack.c.l.b16 %v243
      %v260 = vunpack.c.l.b16 %v244
      %v261 = vunpack.c.l.b16 %v245
      %v262 = vpack.c.b16 %v255, %v254
      %v263 = vpack.c.b16 %v257, %v256
      %v264 = vpack.c.b16 %v259, %v258
      %v265 = vpack.c.b16 %v261, %v260
      %v286 = vunpack.c.l.b16 %v214
      %v287 = vunpack.c.l.b16 %v215
      %v288 = vunpack.c.l.b16 %v216
      %v289 = vunpack.c.l.b16 %v217
      %v290 = vunpack.c.l.b16 %v218
      %v291 = vunpack.c.l.b16 %v219
      %v292 = vunpack.c.l.b16 %v220
      %v293 = vunpack.c.l.b16 %v221
      %v294 = vunpack.c.l.b16 %v222
      %v295 = vunpack.c.l.b16 %v223
      %v296 = vunpack.c.l.b16 %v224
      %v297 = vunpack.c.l.b16 %v225
      %v298 = vunpack.c.l.b16 %v226
      %v299 = vunpack.c.l.b16 %v227
      %v300 = vunpack.c.l.b16 %v228
      %v301 = vunpack.c.l.b16 %v229
      %v302 = vpack.c.b16 %v287, %v286
      %v303 = vpack.c.b16 %v289, %v288
      %v304 = vpack.c.b16 %v291, %v290
      %v305 = vpack.c.b16 %v293, %v292
      %v306 = vpack.c.b16 %v295, %v294
      %v307 = vpack.c.b16 %v297, %v296
      %v308 = vpack.c.b16 %v299, %v298
      %v309 = vpack.c.b16 %v301, %v300
      %318 = vmatpush.bf16.msra.mxu0 %v309
      %319 = vmatpush.bf16.msra.mxu0 %v308
      %320 = vmatpush.bf16.msra.mxu0 %v307
      %321 = vmatpush.bf16.msra.mxu0 %v306
      %322 = vmatpush.bf16.msra.mxu0 %v305
      %323 = vmatpush.bf16.msra.mxu0 %v304
      %324 = vmatpush.bf16.msra.mxu0 %v303
      %325 = vmatpush.bf16.msra.mxu0 %v302
      %326 = vmatmul.bf16.gmra.mxu0 %v262
      %v327 = vpop.f32.mrf.mxu0
      %v328 = vadd.f32 0.0, %v327
      %v329 = vpop.f32.mrf.mxu0
      %v330 = vadd.f32 0.0, %v329
      %331 = vmatmul.bf16.gmra.mxu0 %v263
      %v332 = vpop.f32.mrf.mxu0
      %v333 = vadd.f32 0.0, %v332
      %v334 = vpop.f32.mrf.mxu0
      %v335 = vadd.f32 0.0, %v334
      %336 = vmatmul.bf16.gmra.mxu0 %v264
      %v337 = vpop.f32.mrf.mxu0
      %v338 = vadd.f32 0.0, %v337
      %v339 = vpop.f32.mrf.mxu0
      %v340 = vadd.f32 0.0, %v339
      %341 = vmatmul.bf16.gmra.mxu0 %v265
      %v342 = vpop.f32.mrf.mxu0
      %v343 = vadd.f32 0.0, %v342
      %v344 = vpop.f32.mrf.mxu0
      %v345 = vadd.f32 0.0, %v344
      %346 = vdwg.mxu0
      %v347 = vadd.f32 %v230, %v328
      %v348 = vadd.f32 %v231, %v330
      %v349 = vadd.f32 %v232, %v333
      %v350 = vadd.f32 %v233, %v335
      %v351 = vadd.f32 %v234, %v338
      %v352 = vadd.f32 %v235, %v340
      %v353 = vadd.f32 %v236, %v343
      %v354 = vadd.f32 %v237, %v345
      %355 = vst [vmem:[#allocation2] sm:$0xff] %v347
      %356 = vst [vmem:[#allocation2 + $0x8] sm:$0xff] %v348
      %357 = vst [vmem:[#allocation2 + $0x10] sm:$0xff] %v349
      %358 = vst [vmem:[#allocation2 + $0x18] sm:$0xff] %v350
      %359 = vst [vmem:[#allocation2 + $0x20] sm:$0xff] %v351
      %360 = vst [vmem:[#allocation2 + $0x28] sm:$0xff] %v352
      %361 = vst [vmem:[#allocation2 + $0x30] sm:$0xff] %v353
      %362 = vst [vmem:[#allocation2 + $0x38] sm:$0xff] %v354
      // Predicated region
      $region37: #{gcn_forward.7} parent=31 // pred_check
        %p363 = pneg %p197
      $region38: #{gcn_forward.7} parent=31 // pred_check_branch
        %365 = sbr.rel (%p363) target = $region40
      $region39: #{gcn_forward.7} parent=31 // pred_region
        %v366 = vld [vmem:[#allocation2] sm:$0xff]
        %v367 = vld [vmem:[#allocation2 + $0x8] sm:$0xff]
        %v368 = vld [vmem:[#allocation2 + $0x10] sm:$0xff]
        %v369 = vld [vmem:[#allocation2 + $0x18] sm:$0xff]
        %v370 = vld [vmem:[#allocation2 + $0x20] sm:$0xff]
        %v371 = vld [vmem:[#allocation2 + $0x28] sm:$0xff]
        %v372 = vld [vmem:[#allocation2 + $0x30] sm:$0xff]
        %v373 = vld [vmem:[#allocation2 + $0x38] sm:$0xff]
        %v374 = vld [vmem:[%s2] sm:$0x1]
        %v376 = vperm.slane %v374, 0
        %v378 = vadd.f32 %v366, %v376
        %v379 = vadd.f32 %v367, %v376
        %v380 = vadd.f32 %v368, %v376
        %v381 = vadd.f32 %v369, %v376
        %v382 = vadd.f32 %v370, %v376
        %v383 = vadd.f32 %v371, %v376
        %v384 = vadd.f32 %v372, %v376
        %v385 = vadd.f32 %v373, %v376
        %386 = vst [vmem:[%s195] sm:$0xff] %v378
        %387 = vst [vmem:[%s195 + $0x8] sm:$0xff] %v379
        %388 = vst [vmem:[%s195 + $0x10] sm:$0xff] %v380
        %389 = vst [vmem:[%s195 + $0x18] sm:$0xff] %v381
        %390 = vst [vmem:[%s195 + $0x20] sm:$0xff] %v382
        %391 = vst [vmem:[%s195 + $0x28] sm:$0xff] %v383
        %392 = vst [vmem:[%s195 + $0x30] sm:$0xff] %v384
        %393 = vst [vmem:[%s195 + $0x38] sm:$0xff] %v385
      $region40: #{gcn_forward.7} parent=31 // pred_fallthru
        _
      %s394 = smul.u32 8, %s18
      %p395 = scmp.lt.s32.totalorder %s394, 15
      %s396 = scalar_select %p395, %s394, 15
      %s397 = smul.addr %s396, 8
      %s398 = scalar_lea.vmem %s3, %s397
      // Predicated region
      $region41: #{gcn_forward.7} parent=31 // pred_check
        %p399 = pneg %p114
      $region42: #{gcn_forward.7} parent=31 // pred_check_branch
        %401 = sbr.rel (%p399) target = $region44
      $region43: #{gcn_forward.7} parent=31 // pred_region
        %s402 = smul.u32 8, %s18
      $region44: #{gcn_forward.7} parent=31 // pred_fallthru
        _
    $region32: #{gcn_forward.7} parent=5 // pred_fallthru
      _
    %p403 = scmp.le.s32.totalorder 2, %s9
    // Predicated region
    $region45: #{gcn_forward.7} parent=5 // pred_check
      %p404 = pneg %p403
    $region46: #{gcn_forward.7} parent=5 // pred_check_branch
      %406 = sbr.rel (%p404) target = $region48
    $region47: #{gcn_forward.7} parent=5 // pred_region
      %s407 = ssub.s32 %s9, 2
      // Predicated region
      $region49: #{gcn_forward.7} parent=47 // pred_check
        %p408 = pneg %p120
      $region50: #{gcn_forward.7} parent=47 // pred_check_branch
        %410 = sbr.rel (%p408) target = $region52
      $region51: #{gcn_forward.7} parent=47 // pred_region
        %s411 = smul.u32 8, %s20
        %p412 = scmp.lt.s32.totalorder %s411, 15
        %s413 = scalar_select %p412, %s411, 15
        %s414 = smul.addr %s413, 8
        %s415 = scalar_lea.vmem %s3, %s414
      $region52: #{gcn_forward.7} parent=47 // pred_fallthru
        _
    $region48: #{gcn_forward.7} parent=5 // pred_fallthru
      _
  $region6: #{gcn_forward.7} parent=0 // loop_footer
    %s13 = sadd.s32 1, %s9
  $region7: #{gcn_forward.7} parent=0 // loop_footer_branch
    %8 = sbr.rel target = $region3
  $region8: #{gcn_forward.7} parent=0 // loop_exit
    _

// kernel: gcn_forward.5
$region0: #{gcn_forward.5}
  #allocation0 [shape = 'u32[]', space=smem, size = 0x4, offset = 0x4, fixed_abs, tag = 'smem constant byte address 0x4 - core index']
  #allocation1 [shape = 'u32[72,128]{1,0:T(1,128)}', space=vmem, size = 0x9000, scoped, tag = 'internal scratch']
  #allocation2 [shape = 'f32[64,128]{1,0:T(8,128)}', space=vmem, size = 0x8000, scoped, tag = 'scratch operand']
  %s0 = inlined_call_operand.vmem [shape: bf16[128,128], index: 0, kind: input, shape index: {}]
  %s1 = inlined_call_operand.vmem [shape: bf16[128,128], index: 1, kind: input, shape index: {}]
  %s2 = inlined_call_operand.vmem [shape: f32[1,128], index: 2, kind: input, shape index: {}]
  %s3 = inlined_call_operand.vmem [shape: bf16[128,128], index: 3, kind: output, shape index: {}]
  %s4 = sld [smem:[#allocation0]]
  $region53: #{gcn_forward.5} parent=0
    _
  %s6 = ssub.s32 1, %s4
  %s7 = scalar_select 0, %s6, %s4
  loop: start=0, step=1, limit=4
  $region2: #{gcn_forward.5} parent=0 // loop_pre_header
    _
  $region3: #{gcn_forward.5} parent=0 // loop_header
    %s9 = sphi 0, %s13
    %p10 = scmp.ge.s32.totalorder %s9, 4
    %s16 = sphi 0, %s28
    %s17 = sphi 0, %s24
    %s18 = sphi 0, %s16
    %s19 = sphi 0, %s17
    %s20 = sphi 0, %s18
    %s21 = sphi 0, %s19
    %s33 = sphi 0, %s35
    %s36 = sphi 0, %s33
    %s37 = sphi 0, %s36
    %s53 = sphi 0, %s37
    %s57 = sphi 0, %s57
    %s59 = sphi 0, %s57
    %s60 = sphi 0, %s59
    %s74 = sphi 0, %s60
    %s78 = sphi 0, %s78
    %s80 = sphi 0, %s78
    %s81 = sphi 0, %s80
    %s95 = sphi 0, %s81
    %s101 = sphi 0, %s103
    %s104 = sphi 0, %s101
    %s105 = sphi 0, %s104
    %s121 = sphi 0, %s105
  $region4: #{gcn_forward.5} parent=0 // loop_header_branch
    %12 = sbr.rel (%p10) target = $region8
  $region5: #{gcn_forward.5} parent=0 // loop_body
    %s14 = ssub.s32 %s9, 1
    %s15 = ssub.s32 %s9, 2
    %s22 = sadd.s32 1, %s17
    %p23 = scmp.ge.s32.totalorder %s22, 1
    %s24 = scalar_select %p23, 0, %s22
    %s25 = sadd.s32 1, %s16
    %s26 = scalar_select %p23, %s25, %s16
    %p27 = scmp.ge.s32.totalorder %s26, 2
    %s28 = scalar_select %p27, 0, %s26
    %s29 = ssub.s32 %s16, %s28
    %s30 = ssub.s32 %s17, %s24
    %s31 = sor.u32 %s29, %s30
    %p32 = scmp.eq.s32.totalorder %s31, 0
    %s34 = sadd.s32 %s33, 1
    %s35 = scalar_select %p32, %s33, %s34
    %p38 = pneg %p32
    %p39 = scmp.eq.s32.totalorder %s9, 1
    %p40 = por %p38, %p39
    %p41 = scmp.ne.s32.totalorder %s33, %s36
    %p42 = scmp.eq.s32.totalorder %s9, 0
    %p43 = por %p41, %p42
    %p44 = scmp.ne.s32.totalorder %s33, %s36
    %p45 = scmp.eq.s32.totalorder %s14, 1
    %p46 = por %p44, %p45
    %p47 = scmp.ne.s32.totalorder %s36, %s37
    %p48 = scmp.eq.s32.totalorder %s14, 0
    %p49 = por %p47, %p48
    %p50 = scmp.ne.s32.totalorder %s36, %s37
    %p51 = scmp.eq.s32.totalorder %s15, 1
    %p52 = por %p50, %p51
    %p54 = scmp.ne.s32.totalorder %s37, %s53
    %p55 = scmp.eq.s32.totalorder %s15, 0
    %p56 = por %p54, %p55
    %s58 = sadd.s32 %s57, 1
    %p61 = scmp.eq.s32.totalorder %s9, 1
    %p62 = scmp.ne.s32.totalorder %s57, %s59
    %p63 = scmp.eq.s32.totalorder %s9, 0
    %p64 = por %p62, %p63
    %p65 = scmp.ne.s32.totalorder %s57, %s59
    %p66 = scmp.eq.s32.totalorder %s14, 1
    %p67 = por %p65, %p66
    %p68 = scmp.ne.s32.totalorder %s59, %s60
    %p69 = scmp.eq.s32.totalorder %s14, 0
    %p70 = por %p68, %p69
    %p71 = scmp.ne.s32.totalorder %s59, %s60
    %p72 = scmp.eq.s32.totalorder %s15, 1
    %p73 = por %p71, %p72
    %p75 = scmp.ne.s32.totalorder %s60, %s74
    %p76 = scmp.eq.s32.totalorder %s15, 0
    %p77 = por %p75, %p76
    %s79 = sadd.s32 %s78, 1
    %p82 = scmp.eq.s32.totalorder %s9, 1
    %p83 = scmp.ne.s32.totalorder %s78, %s80
    %p84 = scmp.eq.s32.totalorder %s9, 0
    %p85 = por %p83, %p84
    %p86 = scmp.ne.s32.totalorder %s78, %s80
    %p87 = scmp.eq.s32.totalorder %s14, 1
    %p88 = por %p86, %p87
    %p89 = scmp.ne.s32.totalorder %s80, %s81
    %p90 = scmp.eq.s32.totalorder %s14, 0
    %p91 = por %p89, %p90
    %p92 = scmp.ne.s32.totalorder %s80, %s81
    %p93 = scmp.eq.s32.totalorder %s15, 1
    %p94 = por %p92, %p93
    %p96 = scmp.ne.s32.totalorder %s81, %s95
    %p97 = scmp.eq.s32.totalorder %s15, 0
    %p98 = por %p96, %p97
    %s99 = ssub.s32 %s16, %s28
    %p100 = scmp.eq.s32.totalorder %s99, 0
    %s102 = sadd.s32 %s101, 1
    %s103 = scalar_select %p100, %s101, %s102
    %p106 = pneg %p100
    %p107 = scmp.eq.s32.totalorder %s9, 1
    %p108 = por %p106, %p107
    %p109 = scmp.ne.s32.totalorder %s101, %s104
    %p110 = scmp.eq.s32.totalorder %s9, 0
    %p111 = por %p109, %p110
    %p112 = scmp.ne.s32.totalorder %s101, %s104
    %p113 = scmp.eq.s32.totalorder %s14, 1
    %p114 = por %p112, %p113
    %p115 = scmp.ne.s32.totalorder %s104, %s105
    %p116 = scmp.eq.s32.totalorder %s14, 0
    %p117 = por %p115, %p116
    %p118 = scmp.ne.s32.totalorder %s104, %s105
    %p119 = scmp.eq.s32.totalorder %s15, 1
    %p120 = por %p118, %p119
    %p122 = scmp.ne.s32.totalorder %s105, %s121
    %p123 = scmp.eq.s32.totalorder %s15, 0
    %p124 = por %p122, %p123
    %p125 = scmp.le.s32.totalorder 1, %s9
    %p126 = scmp.lt.s32.totalorder %s9, 3
    %p127 = pnand %p125, %p126
    %p128 = pneg %p127
    // Predicated region
    $region9: #{gcn_forward.5} parent=5 // pred_check
      _
    $region10: #{gcn_forward.5} parent=5 // pred_check_branch
      %130 = sbr.rel (%p127) target = $region12
    $region11: #{gcn_forward.5} parent=5 // pred_region
      %s131 = ssub.s32 %s9, 1
      // Predicated region
      $region13: #{gcn_forward.5} parent=11 // pred_check
        %p132 = pneg %p70
      $region14: #{gcn_forward.5} parent=11 // pred_check_branch
        %134 = sbr.rel (%p132) target = $region16
      $region15: #{gcn_forward.5} parent=11 // pred_region
        _
      $region16: #{gcn_forward.5} parent=11 // pred_fallthru
        _
      // Predicated region
      $region17: #{gcn_forward.5} parent=11 // pred_check
        %p135 = pneg %p91
      $region18: #{gcn_forward.5} parent=11 // pred_check_branch
        %137 = sbr.rel (%p135) target = $region20
      $region19: #{gcn_forward.5} parent=11 // pred_region
        _
      $region20: #{gcn_forward.5} parent=11 // pred_fallthru
        _
    $region12: #{gcn_forward.5} parent=5 // pred_fallthru
      _
    %p138 = scmp.lt.s32.totalorder %s9, 2
    // Predicated region
    $region21: #{gcn_forward.5} parent=5 // pred_check
      %p139 = pneg %p138
    $region22: #{gcn_forward.5} parent=5 // pred_check_branch
      %141 = sbr.rel (%p139) target = $region24
    $region23: #{gcn_forward.5} parent=5 // pred_region
      // Predicated region
      $region25: #{gcn_forward.5} parent=23 // pred_check
        %p142 = pneg %p43
      $region26: #{gcn_forward.5} parent=23 // pred_check_branch
        %144 = sbr.rel (%p142) target = $region28
      $region27: #{gcn_forward.5} parent=23 // pred_region
        %s145 = smul.u32 8, %s16
        %p146 = scmp.lt.s32.totalorder %s145, 15
        %s147 = scalar_select %p146, %s145, 15
        %p148 = scmp.lt.s32.totalorder %s17, 0
        %s149 = scalar_select %p148, %s17, 0
        %s150 = sadd.s32 %s149, %s147
        %s151 = smul.addr %s150, 4
        %s152 = scalar_lea.vmem %s0, %s151
        %s153 = smul.u32 8, %s16
      $region28: #{gcn_forward.5} parent=23 // pred_fallthru
        _
    $region24: #{gcn_forward.5} parent=5 // pred_fallthru
      _
    %p154 = scmp.le.s32.totalorder 1, %s9
    %p155 = scmp.lt.s32.totalorder %s9, 3
    %p156 = pnand %p154, %p155
    %p157 = pneg %p156
    // Predicated region
    $region29: #{gcn_forward.5} parent=5 // pred_check
      _
    $region30: #{gcn_forward.5} parent=5 // pred_check_branch
      %159 = sbr.rel (%p156) target = $region32
    $region31: #{gcn_forward.5} parent=5 // pred_region
      %s160 = ssub.s32 %s9, 1
      %s161 = smul.u32 8, %s18
      %p162 = scmp.lt.s32.totalorder %s161, 15
      %s163 = scalar_select %p162, %s161, 15
      %p164 = scmp.lt.s32.totalorder %s19, 0
      %s165 = scalar_select %p164, %s19, 0
      %s166 = sadd.s32 %s165, %s163
      %s167 = smul.addr %s166, 4
      %s168 = scalar_lea.vmem %s0, %s167
      %p169 = pneg %p49
      %p170 = pneg %p46
      %p171 = pneg %p70
      %p172 = pneg %p67
      %p173 = pneg %p91
      %p174 = pneg %p88
      %p175 = pneg %p117
      %p176 = pneg %p114
      %s177 = smul.u32 8, %s18
      %p178 = scmp.lt.s32.totalorder %s177, 15
      %s179 = scalar_select %p178, %s177, 15
      %s180 = smul.addr %s179, 4
      %s181 = scalar_lea.vmem %s3, %s180
      %s182 = smul.u32 8, %s18
      %p183 = scmp.lt.s32.totalorder %s182, 15
      %s184 = scalar_select %p183, %s182, 15
      %p185 = scmp.lt.s32.totalorder %s19, 0
      %s186 = scalar_select %p185, %s19, 0
      %s187 = sadd.s32 %s186, %s184
      %s188 = smul.addr %s187, 4
      %s189 = scalar_lea.vmem %s0, %s188
      %s190 = smul.u32 8, %s18
      %s191 = smul.u32 8, %s18
      %p192 = scmp.lt.s32.totalorder %s191, 15
      %s193 = scalar_select %p192, %s191, 15
      %s194 = smul.addr %s193, 4
      %s195 = scalar_lea.vmem %s3, %s194
      %s196 = smul.u32 8, %s18
      %p197 = scmp.eq.s32.totalorder %s19, 0
      // Predicated region
      $region33: #{gcn_forward.5} parent=31 // pred_check
        %p198 = pneg %p197
      $region34: #{gcn_forward.5} parent=31 // pred_check_branch
        %200 = sbr.rel (%p198) target = $region36
      $region35: #{gcn_forward.5} parent=31 // pred_region
        %201 = vst [vmem:[#allocation2] sm:$0xff] 0.0
        %202 = vst [vmem:[#allocation2 + $0x8] sm:$0xff] 0.0
        %203 = vst [vmem:[#allocation2 + $0x10] sm:$0xff] 0.0
        %204 = vst [vmem:[#allocation2 + $0x18] sm:$0xff] 0.0
        %205 = vst [vmem:[#allocation2 + $0x20] sm:$0xff] 0.0
        %206 = vst [vmem:[#allocation2 + $0x28] sm:$0xff] 0.0
        %207 = vst [vmem:[#allocation2 + $0x30] sm:$0xff] 0.0
        %208 = vst [vmem:[#allocation2 + $0x38] sm:$0xff] 0.0
      $region36: #{gcn_forward.5} parent=31 // pred_fallthru
        _
      %s209 = smul.u32 %s19, 128
      %s210 = sshra.s32 %s209, 3
      %s211 = sand.u32 %s209, 7
      %s212 = smul.addr %s210, 4
      %s213 = scalar_lea.vmem %s1, %s212
      %v214 = vld [vmem:[%s213] sm:$0xf]
      %v215 = vld [vmem:[%s213 + $0x4] sm:$0xf]
      %v216 = vld [vmem:[%s213 + $0x8] sm:$0xf]
      %v217 = vld [vmem:[%s213 + $0xc] sm:$0xf]
      %v218 = vld [vmem:[%s213 + $0x10] sm:$0xf]
      %v219 = vld [vmem:[%s213 + $0x14] sm:$0xf]
      %v220 = vld [vmem:[%s213 + $0x18] sm:$0xf]
      %v221 = vld [vmem:[%s213 + $0x1c] sm:$0xf]
      %v222 = vld [vmem:[%s213 + $0x20] sm:$0xf]
      %v223 = vld [vmem:[%s213 + $0x24] sm:$0xf]
      %v224 = vld [vmem:[%s213 + $0x28] sm:$0xf]
      %v225 = vld [vmem:[%s213 + $0x2c] sm:$0xf]
      %v226 = vld [vmem:[%s213 + $0x30] sm:$0xf]
      %v227 = vld [vmem:[%s213 + $0x34] sm:$0xf]
      %v228 = vld [vmem:[%s213 + $0x38] sm:$0xf]
      %v229 = vld [vmem:[%s213 + $0x3c] sm:$0xf]
      %v230 = vld [vmem:[#allocation2] sm:$0xff]
      %v231 = vld [vmem:[#allocation2 + $0x8] sm:$0xff]
      %v232 = vld [vmem:[#allocation2 + $0x10] sm:$0xff]
      %v233 = vld [vmem:[#allocation2 + $0x18] sm:$0xff]
      %v234 = vld [vmem:[#allocation2 + $0x20] sm:$0xff]
      %v235 = vld [vmem:[#allocation2 + $0x28] sm:$0xff]
      %v236 = vld [vmem:[#allocation2 + $0x30] sm:$0xff]
      %v237 = vld [vmem:[#allocation2 + $0x38] sm:$0xff]
      %v238 = vld [vmem:[%s189] sm:$0xf]
      %v239 = vld [vmem:[%s189 + $0x4] sm:$0xf]
      %v240 = vld [vmem:[%s189 + $0x8] sm:$0xf]
      %v241 = vld [vmem:[%s189 + $0xc] sm:$0xf]
      %v242 = vld [vmem:[%s189 + $0x10] sm:$0xf]
      %v243 = vld [vmem:[%s189 + $0x14] sm:$0xf]
      %v244 = vld [vmem:[%s189 + $0x18] sm:$0xf]
      %v245 = vld [vmem:[%s189 + $0x1c] sm:$0xf]
      %v254 = vunpack.c.l.b16 %v238
      %v255 = vunpack.c.l.b16 %v239
      %v256 = vunpack.c.l.b16 %v240
      %v257 = vunpack.c.l.b16 %v241
      %v258 = vunpack.c.l.b16 %v242
      %v259 = vunpack.c.l.b16 %v243
      %v260 = vunpack.c.l.b16 %v244
      %v261 = vunpack.c.l.b16 %v245
      %v262 = vpack.c.b16 %v255, %v254
      %v263 = vpack.c.b16 %v257, %v256
      %v264 = vpack.c.b16 %v259, %v258
      %v265 = vpack.c.b16 %v261, %v260
      %v286 = vunpack.c.l.b16 %v214
      %v287 = vunpack.c.l.b16 %v215
      %v288 = vunpack.c.l.b16 %v216
      %v289 = vunpack.c.l.b16 %v217
      %v290 = vunpack.c.l.b16 %v218
      %v291 = vunpack.c.l.b16 %v219
      %v292 = vunpack.c.l.b16 %v220
      %v293 = vunpack.c.l.b16 %v221
      %v294 = vunpack.c.l.b16 %v222
      %v295 = vunpack.c.l.b16 %v223
      %v296 = vunpack.c.l.b16 %v224
      %v297 = vunpack.c.l.b16 %v225
      %v298 = vunpack.c.l.b16 %v226
      %v299 = vunpack.c.l.b16 %v227
      %v300 = vunpack.c.l.b16 %v228
      %v301 = vunpack.c.l.b16 %v229
      %v302 = vpack.c.b16 %v287, %v286
      %v303 = vpack.c.b16 %v289, %v288
      %v304 = vpack.c.b16 %v291, %v290
      %v305 = vpack.c.b16 %v293, %v292
      %v306 = vpack.c.b16 %v295, %v294
      %v307 = vpack.c.b16 %v297, %v296
      %v308 = vpack.c.b16 %v299, %v298
      %v309 = vpack.c.b16 %v301, %v300
      %318 = vmatpush.bf16.msra.mxu0 %v309
      %319 = vmatpush.bf16.msra.mxu0 %v308
      %320 = vmatpush.bf16.msra.mxu0 %v307
      %321 = vmatpush.bf16.msra.mxu0 %v306
      %322 = vmatpush.bf16.msra.mxu0 %v305
      %323 = vmatpush.bf16.msra.mxu0 %v304
      %324 = vmatpush.bf16.msra.mxu0 %v303
      %325 = vmatpush.bf16.msra.mxu0 %v302
      %326 = vmatmul.bf16.gmra.mxu0 %v262
      %v327 = vpop.f32.mrf.mxu0
      %v328 = vadd.f32 0.0, %v327
      %v329 = vpop.f32.mrf.mxu0
      %v330 = vadd.f32 0.0, %v329
      %331 = vmatmul.bf16.gmra.mxu0 %v263
      %v332 = vpop.f32.mrf.mxu0
      %v333 = vadd.f32 0.0, %v332
      %v334 = vpop.f32.mrf.mxu0
      %v335 = vadd.f32 0.0, %v334
      %336 = vmatmul.bf16.gmra.mxu0 %v264
      %v337 = vpop.f32.mrf.mxu0
      %v338 = vadd.f32 0.0, %v337
      %v339 = vpop.f32.mrf.mxu0
      %v340 = vadd.f32 0.0, %v339
      %341 = vmatmul.bf16.gmra.mxu0 %v265
      %v342 = vpop.f32.mrf.mxu0
      %v343 = vadd.f32 0.0, %v342
      %v344 = vpop.f32.mrf.mxu0
      %v345 = vadd.f32 0.0, %v344
      %346 = vdwg.mxu0
      %v347 = vadd.f32 %v230, %v328
      %v348 = vadd.f32 %v231, %v330
      %v349 = vadd.f32 %v232, %v333
      %v350 = vadd.f32 %v233, %v335
      %v351 = vadd.f32 %v234, %v338
      %v352 = vadd.f32 %v235, %v340
      %v353 = vadd.f32 %v236, %v343
      %v354 = vadd.f32 %v237, %v345
      %355 = vst [vmem:[#allocation2] sm:$0xff] %v347
      %356 = vst [vmem:[#allocation2 + $0x8] sm:$0xff] %v348
      %357 = vst [vmem:[#allocation2 + $0x10] sm:$0xff] %v349
      %358 = vst [vmem:[#allocation2 + $0x18] sm:$0xff] %v350
      %359 = vst [vmem:[#allocation2 + $0x20] sm:$0xff] %v351
      %360 = vst [vmem:[#allocation2 + $0x28] sm:$0xff] %v352
      %361 = vst [vmem:[#allocation2 + $0x30] sm:$0xff] %v353
      %362 = vst [vmem:[#allocation2 + $0x38] sm:$0xff] %v354
      // Predicated region
      $region37: #{gcn_forward.5} parent=31 // pred_check
        %p363 = pneg %p197
      $region38: #{gcn_forward.5} parent=31 // pred_check_branch
        %365 = sbr.rel (%p363) target = $region40
      $region39: #{gcn_forward.5} parent=31 // pred_region
        %v366 = vld [vmem:[#allocation2] sm:$0xff]
        %v367 = vld [vmem:[#allocation2 + $0x8] sm:$0xff]
        %v368 = vld [vmem:[#allocation2 + $0x10] sm:$0xff]
        %v369 = vld [vmem:[#allocation2 + $0x18] sm:$0xff]
        %v370 = vld [vmem:[#allocation2 + $0x20] sm:$0xff]
        %v371 = vld [vmem:[#allocation2 + $0x28] sm:$0xff]
        %v372 = vld [vmem:[#allocation2 + $0x30] sm:$0xff]
        %v373 = vld [vmem:[#allocation2 + $0x38] sm:$0xff]
        %v374 = vld [vmem:[%s2] sm:$0x1]
        %v376 = vperm.slane %v374, 0
        %v378 = vadd.f32 %v366, %v376
        %v379 = vadd.f32 %v367, %v376
        %v380 = vadd.f32 %v368, %v376
        %v381 = vadd.f32 %v369, %v376
        %v382 = vadd.f32 %v370, %v376
        %v383 = vadd.f32 %v371, %v376
        %v384 = vadd.f32 %v372, %v376
        %v385 = vadd.f32 %v373, %v376
        %v386 = vmax.f32 %v378, 0.0
        %v387 = vmax.f32 %v379, 0.0
        %v388 = vmax.f32 %v380, 0.0
        %v389 = vmax.f32 %v381, 0.0
        %v390 = vmax.f32 %v382, 0.0
        %v391 = vmax.f32 %v383, 0.0
        %v392 = vmax.f32 %v384, 0.0
        %v393 = vmax.f32 %v385, 0.0
        %v394 = vpack.c.bf16 %v386, %v386
        %v395 = vpack.c.bf16 %v387, %v387
        %v396 = vpack.c.bf16 %v388, %v388
        %v397 = vpack.c.bf16 %v389, %v389
        %v398 = vpack.c.bf16 %v390, %v390
        %v399 = vpack.c.bf16 %v391, %v391
        %v400 = vpack.c.bf16 %v392, %v392
        %v401 = vpack.c.bf16 %v393, %v393
        %402 = vst [vmem:[%s195] sm:$0xf] %v394
        %403 = vst [vmem:[%s195 + $0x4] sm:$0xf] %v395
        %404 = vst [vmem:[%s195 + $0x8] sm:$0xf] %v396
        %405 = vst [vmem:[%s195 + $0xc] sm:$0xf] %v397
        %406 = vst [vmem:[%s195 + $0x10] sm:$0xf] %v398
        %407 = vst [vmem:[%s195 + $0x14] sm:$0xf] %v399
        %408 = vst [vmem:[%s195 + $0x18] sm:$0xf] %v400
        %409 = vst [vmem:[%s195 + $0x1c] sm:$0xf] %v401
      $region40: #{gcn_forward.5} parent=31 // pred_fallthru
        _
      %s410 = smul.u32 8, %s18
      %p411 = scmp.lt.s32.totalorder %s410, 15
      %s412 = scalar_select %p411, %s410, 15
      %s413 = smul.addr %s412, 4
      %s414 = scalar_lea.vmem %s3, %s413
      // Predicated region
      $region41: #{gcn_forward.5} parent=31 // pred_check
        %p415 = pneg %p114
      $region42: #{gcn_forward.5} parent=31 // pred_check_branch
        %417 = sbr.rel (%p415) target = $region44
      $region43: #{gcn_forward.5} parent=31 // pred_region
        %s418 = smul.u32 8, %s18
      $region44: #{gcn_forward.5} parent=31 // pred_fallthru
        _
    $region32: #{gcn_forward.5} parent=5 // pred_fallthru
      _
    %p419 = scmp.le.s32.totalorder 2, %s9
    // Predicated region
    $region45: #{gcn_forward.5} parent=5 // pred_check
      %p420 = pneg %p419
    $region46: #{gcn_forward.5} parent=5 // pred_check_branch
      %422 = sbr.rel (%p420) target = $region48
    $region47: #{gcn_forward.5} parent=5 // pred_region
      %s423 = ssub.s32 %s9, 2
      // Predicated region
      $region49: #{gcn_forward.5} parent=47 // pred_check
        %p424 = pneg %p120
      $region50: #{gcn_forward.5} parent=47 // pred_check_branch
        %426 = sbr.rel (%p424) target = $region52
      $region51: #{gcn_forward.5} parent=47 // pred_region
        %s427 = smul.u32 8, %s20
        %p428 = scmp.lt.s32.totalorder %s427, 15
        %s429 = scalar_select %p428, %s427, 15
        %s430 = smul.addr %s429, 4
        %s431 = scalar_lea.vmem %s3, %s430
      $region52: #{gcn_forward.5} parent=47 // pred_fallthru
        _
    $region48: #{gcn_forward.5} parent=5 // pred_fallthru
      _
  $region6: #{gcn_forward.5} parent=0 // loop_footer
    %s13 = sadd.s32 1, %s9
  $region7: #{gcn_forward.5} parent=0 // loop_footer_branch
    %8 = sbr.rel target = $region3
  $region8: #{gcn_forward.5} parent=0 // loop_exit
    _

</llo_original>
